<compile_context>
chip_gen: v6e
topology: v6e:2x2x1
jax: 0.10.0
libtpu: 0.0.40
codegen_flags: <defaults>
</compile_context>

<pallas_src>
import functools

import jax
import jax.numpy as jnp
from jax import lax
from jax.experimental import pallas as pl
from jax.experimental.pallas import tpu as pltpu


def _lstm_classifier_kernel(pg_ref, w_hh_ref, a_ref, b_ref, w_out_ref, b_out_ref,
                            out_ref, *, T, Bt, H, L):
    """LSTM recurrence + classification head for one batch tile.

    pg_ref   : (T, Bt, 4H) pre-scaled gate pre-activations (x @ W_ih^T + bias, already
                           multiplied by the sigmoid-identity pre-scale per gate band).
    w_hh_ref : (4H, 4H)    pre-scaled W_hh^T, rows H..4H-1 zero.
    a_ref    : (1, 4H)     post-tanh scale  per gate band [0.5, 0.5, 1.0, 0.5].
    b_ref    : (1, 4H)     post-tanh offset per gate band [0.5, 0.5, 0.0, 0.5].
    w_out_ref: (4H, Lp)    hidden2label^T, rows >= H and cols >= L zero.
    b_out_ref: (1, Lp)
    out_ref  : (Bt, Lp)    softmax probabilities (lanes >= L are zero).
    """
    H4 = 4 * H
    w_hh = w_hh_ref[...]                                   # loop-invariant, hoisted
    a_sc = jnp.broadcast_to(a_ref[...], (Bt, H4))          # hoisted broadcasts (no CSE in-loop)
    b_of = jnp.broadcast_to(b_ref[...], (Bt, H4))

    def step(t, carry):
        h, c = carry
        # Serial-path MXU work: one (Bt,4H) @ (4H,4H) tile per step.
        z = pg_ref[t] + jnp.dot(h, w_hh, preferred_element_type=jnp.float32)
        # All four gates with a single EUP tanh over the packed band:
        #   i,f,o = 0.5*tanh(0.5*x)+0.5 (= sigmoid, pre-scale folded into pg / W_hh),
        #   g     = tanh(x).
        act = a_sc * jnp.tanh(z) + b_of                    # [ i | f | g | o ]
        # Lane-align f/g/o with the i band (lanes 0..H-1) via XLU rotations.
        f_al = pltpu.roll(act, 3 * H, axis=1)
        g_al = pltpu.roll(act, 2 * H, axis=1)
        o_al = pltpu.roll(act, 1 * H, axis=1)
        c_new = f_al * c + act * g_al                      # real cell state in lanes 0..H-1
        h_new = o_al * jnp.tanh(c_new)                     # junk lanes bounded; zero W rows kill them
        return h_new, c_new

    h0 = jnp.zeros((Bt, H4), jnp.float32)                  # init_hidden() -> zeros
    c0 = jnp.zeros((Bt, H4), jnp.float32)
    h, _ = lax.fori_loop(0, T, step, (h0, c0),
                         unroll=True if T <= 16 else 4)

    # hidden2label + numerically-stable masked softmax on a lane-dense (Bt, Lp) block.
    logits = (jnp.dot(h, w_out_ref[...], preferred_element_type=jnp.float32)
              + b_out_ref[...])
    lane = lax.broadcasted_iota(jnp.int32, logits.shape, 1)
    valid = lane < L
    logits = jnp.where(valid, logits, -1e30)
    m = jnp.max(logits, axis=-1, keepdims=True)
    e = jnp.where(valid, jnp.exp(logits - m), 0.0)
    out_ref[...] = e / jnp.sum(e, axis=-1, keepdims=True)


def lstm_classifier_forward(tokens, emb_table, w_ih, w_hh, b_ih, b_hh, w_out, b_out):
    """tokens: (B, T) int32. Returns (B, L) softmax probabilities (L = w_out.shape[0])."""
    B, T = tokens.shape
    H = w_hh.shape[1]
    H4 = 4 * H
    L = w_out.shape[0]

    LANES = 128
    Lp = ((L + LANES - 1) // LANES) * LANES

    # Sigmoid-via-tanh identity per gate band (PyTorch gate order [i, f, g, o]):
    #   sigma(x) = 0.5 * tanh(0.5 * x) + 0.5 ; tanh(x) = 1.0 * tanh(1.0 * x) + 0.0
    def band(vals):
        return jnp.concatenate([jnp.full((H,), v, jnp.float32) for v in vals])

    s_band = band((0.5, 0.5, 1.0, 0.5))                    # pre-scale (folded into weights)
    a_band = band((0.5, 0.5, 1.0, 0.5)).reshape(1, H4)     # post-tanh scale
    o_band = band((0.5, 0.5, 0.0, 0.5)).reshape(1, H4)     # post-tanh offset

    # Input path fully hoisted: embedding + input projection + bias + pre-scale fused
    # into one (V, 4H) table, gathered time-major -> (T, B, 4H).
    bias = b_ih + b_hh
    proj_table = (emb_table @ w_ih.T + bias) * s_band      # (V, 4H)
    pg = proj_table[tokens.T]                              # (T, B, 4H)

    # Recurrent weights: pre-scaled W_hh^T, contraction dim padded H -> 4H so the packed
    # (B, 4H) hidden vreg (real data in lanes 0..H-1) is the MXU LHS directly.
    w_hh_p = jnp.pad(w_hh.T * s_band[None, :], ((0, H4 - H), (0, 0)))   # (4H, 4H)
    w_out_p = jnp.pad(w_out.T, ((0, H4 - H), (0, Lp - L)))              # (4H, Lp)
    b_out_p = jnp.pad(b_out, (0, Lp - L)).reshape(1, Lp)                # (1, Lp)

    # Batch tiling: recurrences are independent per batch row.  Multiple tiles let the
    # pg DMA of tile j+1 overlap the recurrence of tile j and (on v7x) spread across
    # TensorCores via the "parallel" grid axis.
    if B >= 16 and B % 8 == 0:
        Bt = 8
    else:
        Bt = B
    n_tiles = B // Bt

    kernel = functools.partial(_lstm_classifier_kernel, T=T, Bt=Bt, H=H, L=L)

    grid_spec = pltpu.PrefetchScalarGridSpec(
        num_scalar_prefetch=0,
        grid=(n_tiles,),
        in_specs=[
            pl.BlockSpec((T, Bt, H4), lambda j: (0, j, 0)),   # gate pre-activations
            pl.BlockSpec((H4, H4), lambda j: (0, 0)),         # W_hh^T (scaled, padded)
            pl.BlockSpec((1, H4), lambda j: (0, 0)),          # post-tanh scale
            pl.BlockSpec((1, H4), lambda j: (0, 0)),          # post-tanh offset
            pl.BlockSpec((H4, Lp), lambda j: (0, 0)),         # hidden2label^T (padded)
            pl.BlockSpec((1, Lp), lambda j: (0, 0)),          # hidden2label bias
        ],
        out_specs=pl.BlockSpec((Bt, Lp), lambda j: (j, 0)),   # lane-dense output block
    )

    # Explicit scoped-VMEM budget (conservative: everything double-buffered x2 margin),
    # never above the smallest cross-generation safe ceiling.
    per_buf_bytes = 4 * (T * Bt * H4 + H4 * H4 + H4 * Lp + 2 * H4 + Lp + Bt * Lp)
    vmem_limit = int(min(32 << 20, max(16 << 20, 4 * per_buf_bytes)))

    probs_padded = pl.pallas_call(
        kernel,
        out_shape=jax.ShapeDtypeStruct((B, Lp), jnp.float32),
        grid_spec=grid_spec,
        compiler_params=pltpu.CompilerParams(
            dimension_semantics=("parallel",),
            vmem_limit_bytes=vmem_limit),
    )(pg, w_hh_p, a_band, o_band, w_out_p, b_out_p)

    return probs_padded[:, :L]


def lstm_classifier_reference(tokens, emb_table, w_ih, w_hh, b_ih, b_hh, w_out, b_out):
    """Pure-JAX reference mirroring torch.nn.LSTM + Linear + softmax."""
    B, T = tokens.shape
    H = w_hh.shape[1]
    embeds = emb_table[tokens]                 # (B, T, E)
    h = jnp.zeros((B, H), jnp.float32)
    c = jnp.zeros((B, H), jnp.float32)
    for t in range(T):
        x = embeds[:, t, :]
        gates = x @ w_ih.T + h @ w_hh.T + b_ih + b_hh
        i_g = jax.nn.sigmoid(gates[:, 0 * H:1 * H])
        f_g = jax.nn.sigmoid(gates[:, 1 * H:2 * H])
        g_g = jnp.tanh(gates[:, 2 * H:3 * H])
        o_g = jax.nn.sigmoid(gates[:, 3 * H:4 * H])
        c = f_g * c + i_g * g_g
        h = o_g * jnp.tanh(c)
    logits = h @ w_out.T + b_out
    return jax.nn.softmax(logits, axis=1)


if __name__ == "__main__":
    # Small shapes consistent with the module's forward:
    B, T = 8, 8                   # batch, sequence length
    E, H = 16, 32                 # embedding_dim, hidden_dim (4H == 128 lane band)
    V = 50                        # vocab_size
    L = 3                         # output classes (hidden2label -> 3)

    key = jax.random.PRNGKey(0)
    ks = jax.random.split(key, 8)

    tokens = jax.random.randint(ks[0], (B, T), 0, V, dtype=jnp.int32)
    emb_table = jax.random.normal(ks[1], (V, E), jnp.float32) * 0.1
    w_ih = jax.random.normal(ks[2], (4 * H, E), jnp.float32) * 0.1
    w_hh = jax.random.normal(ks[3], (4 * H, H), jnp.float32) * 0.1
    b_ih = jax.random.normal(ks[4], (4 * H,), jnp.float32) * 0.1
    b_hh = jax.random.normal(ks[5], (4 * H,), jnp.float32) * 0.1
    w_out = jax.random.normal(ks[6], (L, H), jnp.float32) * 0.1
    b_out = jax.random.normal(ks[7], (L,), jnp.float32) * 0.1

    probs = lstm_classifier_forward(tokens, emb_table, w_ih, w_hh,
                                    b_ih, b_hh, w_out, b_out)
    probs = jax.block_until_ready(probs)

    ref = lstm_classifier_reference(tokens, emb_table, w_ih, w_hh,
                                    b_ih, b_hh, w_out, b_out)
    assert probs.shape == (B, L)
    assert jnp.allclose(probs, ref, atol=5e-5, rtol=5e-5), "mismatch vs reference"
    assert jnp.allclose(jnp.sum(probs, axis=1), 1.0, atol=1e-5), "softmax rows != 1"

    print("KERNEL_OK")
</pallas_src>

<mosaic_0001>
module attributes {stable_mosaic.version = 11 : i64} {
  func.func @_lstm_classifier_kernel(%arg0: i32, %arg1: memref<8x8x128xf32, #tpu.memory_space<vmem>>, %arg2: memref<128x128xf32, #tpu.memory_space<vmem>>, %arg3: memref<1x128xf32, #tpu.memory_space<vmem>>, %arg4: memref<1x128xf32, #tpu.memory_space<vmem>>, %arg5: memref<128x128xf32, #tpu.memory_space<vmem>>, %arg6: memref<1x128xf32, #tpu.memory_space<vmem>>, %arg7: memref<8x128xf32, #tpu.memory_space<vmem>>) attributes {dimension_semantics = [#tpu.dimension_semantics<parallel>], iteration_bounds = array<i64: 1>, scalar_prefetch = 0 : i64, scratch_operands = 0 : i64, tpu.core_type = #tpu.core_type<tc>, window_params = [{transform_indices = @transform_0, window_bounds = array<i64: 8, 8, 128>}, {pipeline_mode = #tpu.pipeline_mode<synchronous>, transform_indices = @transform_1, window_bounds = array<i64: 128, 128>}, {pipeline_mode = #tpu.pipeline_mode<synchronous>, transform_indices = @transform_2, window_bounds = array<i64: 1, 128>}, {pipeline_mode = #tpu.pipeline_mode<synchronous>, transform_indices = @transform_3, window_bounds = array<i64: 1, 128>}, {pipeline_mode = #tpu.pipeline_mode<synchronous>, transform_indices = @transform_4, window_bounds = array<i64: 128, 128>}, {pipeline_mode = #tpu.pipeline_mode<synchronous>, transform_indices = @transform_5, window_bounds = array<i64: 1, 128>}, {transform_indices = @transform_6, window_bounds = array<i64: 8, 128>}]} {
    %c0 = arith.constant 0 : index
    %c0_0 = arith.constant 0 : index
    %0 = vector.load %arg2[%c0, %c0_0] : memref<128x128xf32, #tpu.memory_space<vmem>>, vector<128x128xf32>
    %c0_1 = arith.constant 0 : index
    %c0_2 = arith.constant 0 : index
    %1 = vector.load %arg3[%c0_1, %c0_2] : memref<1x128xf32, #tpu.memory_space<vmem>>, vector<1x128xf32>
    %2 = vector.shape_cast %1 : vector<1x128xf32> to vector<1x128xf32>
    %3 = vector.broadcast %2 : vector<1x128xf32> to vector<8x128xf32>
    %c0_3 = arith.constant 0 : index
    %c0_4 = arith.constant 0 : index
    %4 = vector.load %arg4[%c0_3, %c0_4] : memref<1x128xf32, #tpu.memory_space<vmem>>, vector<1x128xf32>
    %5 = vector.shape_cast %4 : vector<1x128xf32> to vector<1x128xf32>
    %6 = vector.broadcast %5 : vector<1x128xf32> to vector<8x128xf32>
    %cst = arith.constant 0.000000e+00 : f32
    %7 = vector.broadcast %cst : f32 to vector<8x128xf32>
    %cst_5 = arith.constant 0.000000e+00 : f32
    %8 = vector.broadcast %cst_5 : f32 to vector<8x128xf32>
    %c0_i32 = arith.constant 0 : i32
    %9 = arith.index_cast %c0_i32 : i32 to index
    %c0_6 = arith.constant 0 : index
    %c0_7 = arith.constant 0 : index
    %10 = vector.load %arg1[%9, %c0_6, %c0_7] : memref<8x8x128xf32, #tpu.memory_space<vmem>>, vector<1x8x128xf32>
    %11 = vector.shape_cast %10 : vector<1x8x128xf32> to vector<8x128xf32>
    %cst_8 = arith.constant dense<0.000000e+00> : vector<8x128xf32>
    %12 = tpu.matmul %7, %0, %cst_8 {dimension_numbers = #tpu.dot_dimension_numbers<[1], [0], [0], [1], [0, 0, 1, 1], [], []>} : vector<8x128xf32>, vector<128x128xf32>, vector<8x128xf32> -> vector<8x128xf32>
    %13 = arith.addf %11, %12 : vector<8x128xf32>
    %14 = math.tanh %13 : vector<8x128xf32>
    %15 = arith.mulf %3, %14 : vector<8x128xf32>
    %16 = arith.addf %15, %6 : vector<8x128xf32>
    %c96_i32 = arith.constant 96 : i32
    %17 = tpu.dynamic_rotate %16 by %c96_i32 dim 1 : vector<8x128xf32>, i32 -> vector<8x128xf32>
    %c64_i32 = arith.constant 64 : i32
    %18 = tpu.dynamic_rotate %16 by %c64_i32 dim 1 : vector<8x128xf32>, i32 -> vector<8x128xf32>
    %c32_i32 = arith.constant 32 : i32
    %19 = tpu.dynamic_rotate %16 by %c32_i32 dim 1 : vector<8x128xf32>, i32 -> vector<8x128xf32>
    %20 = arith.mulf %17, %8 : vector<8x128xf32>
    %21 = arith.mulf %16, %18 : vector<8x128xf32>
    %22 = arith.addf %20, %21 : vector<8x128xf32>
    %23 = math.tanh %22 : vector<8x128xf32>
    %24 = arith.mulf %19, %23 : vector<8x128xf32>
    %c1_i32 = arith.constant 1 : i32
    %25 = arith.index_cast %c1_i32 : i32 to index
    %c0_9 = arith.constant 0 : index
    %c0_10 = arith.constant 0 : index
    %26 = vector.load %arg1[%25, %c0_9, %c0_10] : memref<8x8x128xf32, #tpu.memory_space<vmem>>, vector<1x8x128xf32>
    %27 = vector.shape_cast %26 : vector<1x8x128xf32> to vector<8x128xf32>
    %cst_11 = arith.constant dense<0.000000e+00> : vector<8x128xf32>
    %28 = tpu.matmul %24, %0, %cst_11 {dimension_numbers = #tpu.dot_dimension_numbers<[1], [0], [0], [1], [0, 0, 1, 1], [], []>} : vector<8x128xf32>, vector<128x128xf32>, vector<8x128xf32> -> vector<8x128xf32>
    %29 = arith.addf %27, %28 : vector<8x128xf32>
    %30 = math.tanh %29 : vector<8x128xf32>
    %31 = arith.mulf %3, %30 : vector<8x128xf32>
    %32 = arith.addf %31, %6 : vector<8x128xf32>
    %c96_i32_12 = arith.constant 96 : i32
    %33 = tpu.dynamic_rotate %32 by %c96_i32_12 dim 1 : vector<8x128xf32>, i32 -> vector<8x128xf32>
    %c64_i32_13 = arith.constant 64 : i32
    %34 = tpu.dynamic_rotate %32 by %c64_i32_13 dim 1 : vector<8x128xf32>, i32 -> vector<8x128xf32>
    %c32_i32_14 = arith.constant 32 : i32
    %35 = tpu.dynamic_rotate %32 by %c32_i32_14 dim 1 : vector<8x128xf32>, i32 -> vector<8x128xf32>
    %36 = arith.mulf %33, %22 : vector<8x128xf32>
    %37 = arith.mulf %32, %34 : vector<8x128xf32>
    %38 = arith.addf %36, %37 : vector<8x128xf32>
    %39 = math.tanh %38 : vector<8x128xf32>
    %40 = arith.mulf %35, %39 : vector<8x128xf32>
    %c2_i32 = arith.constant 2 : i32
    %41 = arith.index_cast %c2_i32 : i32 to index
    %c0_15 = arith.constant 0 : index
    %c0_16 = arith.constant 0 : index
    %42 = vector.load %arg1[%41, %c0_15, %c0_16] : memref<8x8x128xf32, #tpu.memory_space<vmem>>, vector<1x8x128xf32>
    %43 = vector.shape_cast %42 : vector<1x8x128xf32> to vector<8x128xf32>
    %cst_17 = arith.constant dense<0.000000e+00> : vector<8x128xf32>
    %44 = tpu.matmul %40, %0, %cst_17 {dimension_numbers = #tpu.dot_dimension_numbers<[1], [0], [0], [1], [0, 0, 1, 1], [], []>} : vector<8x128xf32>, vector<128x128xf32>, vector<8x128xf32> -> vector<8x128xf32>
    %45 = arith.addf %43, %44 : vector<8x128xf32>
    %46 = math.tanh %45 : vector<8x128xf32>
    %47 = arith.mulf %3, %46 : vector<8x128xf32>
    %48 = arith.addf %47, %6 : vector<8x128xf32>
    %c96_i32_18 = arith.constant 96 : i32
    %49 = tpu.dynamic_rotate %48 by %c96_i32_18 dim 1 : vector<8x128xf32>, i32 -> vector<8x128xf32>
    %c64_i32_19 = arith.constant 64 : i32
    %50 = tpu.dynamic_rotate %48 by %c64_i32_19 dim 1 : vector<8x128xf32>, i32 -> vector<8x128xf32>
    %c32_i32_20 = arith.constant 32 : i32
    %51 = tpu.dynamic_rotate %48 by %c32_i32_20 dim 1 : vector<8x128xf32>, i32 -> vector<8x128xf32>
    %52 = arith.mulf %49, %38 : vector<8x128xf32>
    %53 = arith.mulf %48, %50 : vector<8x128xf32>
    %54 = arith.addf %52, %53 : vector<8x128xf32>
    %55 = math.tanh %54 : vector<8x128xf32>
    %56 = arith.mulf %51, %55 : vector<8x128xf32>
    %c3_i32 = arith.constant 3 : i32
    %57 = arith.index_cast %c3_i32 : i32 to index
    %c0_21 = arith.constant 0 : index
    %c0_22 = arith.constant 0 : index
    %58 = vector.load %arg1[%57, %c0_21, %c0_22] : memref<8x8x128xf32, #tpu.memory_space<vmem>>, vector<1x8x128xf32>
    %59 = vector.shape_cast %58 : vector<1x8x128xf32> to vector<8x128xf32>
    %cst_23 = arith.constant dense<0.000000e+00> : vector<8x128xf32>
    %60 = tpu.matmul %56, %0, %cst_23 {dimension_numbers = #tpu.dot_dimension_numbers<[1], [0], [0], [1], [0, 0, 1, 1], [], []>} : vector<8x128xf32>, vector<128x128xf32>, vector<8x128xf32> -> vector<8x128xf32>
    %61 = arith.addf %59, %60 : vector<8x128xf32>
    %62 = math.tanh %61 : vector<8x128xf32>
    %63 = arith.mulf %3, %62 : vector<8x128xf32>
    %64 = arith.addf %63, %6 : vector<8x128xf32>
    %c96_i32_24 = arith.constant 96 : i32
    %65 = tpu.dynamic_rotate %64 by %c96_i32_24 dim 1 : vector<8x128xf32>, i32 -> vector<8x128xf32>
    %c64_i32_25 = arith.constant 64 : i32
    %66 = tpu.dynamic_rotate %64 by %c64_i32_25 dim 1 : vector<8x128xf32>, i32 -> vector<8x128xf32>
    %c32_i32_26 = arith.constant 32 : i32
    %67 = tpu.dynamic_rotate %64 by %c32_i32_26 dim 1 : vector<8x128xf32>, i32 -> vector<8x128xf32>
    %68 = arith.mulf %65, %54 : vector<8x128xf32>
    %69 = arith.mulf %64, %66 : vector<8x128xf32>
    %70 = arith.addf %68, %69 : vector<8x128xf32>
    %71 = math.tanh %70 : vector<8x128xf32>
    %72 = arith.mulf %67, %71 : vector<8x128xf32>
    %c4_i32 = arith.constant 4 : i32
    %73 = arith.index_cast %c4_i32 : i32 to index
    %c0_27 = arith.constant 0 : index
    %c0_28 = arith.constant 0 : index
    %74 = vector.load %arg1[%73, %c0_27, %c0_28] : memref<8x8x128xf32, #tpu.memory_space<vmem>>, vector<1x8x128xf32>
    %75 = vector.shape_cast %74 : vector<1x8x128xf32> to vector<8x128xf32>
    %cst_29 = arith.constant dense<0.000000e+00> : vector<8x128xf32>
    %76 = tpu.matmul %72, %0, %cst_29 {dimension_numbers = #tpu.dot_dimension_numbers<[1], [0], [0], [1], [0, 0, 1, 1], [], []>} : vector<8x128xf32>, vector<128x128xf32>, vector<8x128xf32> -> vector<8x128xf32>
    %77 = arith.addf %75, %76 : vector<8x128xf32>
    %78 = math.tanh %77 : vector<8x128xf32>
    %79 = arith.mulf %3, %78 : vector<8x128xf32>
    %80 = arith.addf %79, %6 : vector<8x128xf32>
    %c96_i32_30 = arith.constant 96 : i32
    %81 = tpu.dynamic_rotate %80 by %c96_i32_30 dim 1 : vector<8x128xf32>, i32 -> vector<8x128xf32>
    %c64_i32_31 = arith.constant 64 : i32
    %82 = tpu.dynamic_rotate %80 by %c64_i32_31 dim 1 : vector<8x128xf32>, i32 -> vector<8x128xf32>
    %c32_i32_32 = arith.constant 32 : i32
    %83 = tpu.dynamic_rotate %80 by %c32_i32_32 dim 1 : vector<8x128xf32>, i32 -> vector<8x128xf32>
    %84 = arith.mulf %81, %70 : vector<8x128xf32>
    %85 = arith.mulf %80, %82 : vector<8x128xf32>
    %86 = arith.addf %84, %85 : vector<8x128xf32>
    %87 = math.tanh %86 : vector<8x128xf32>
    %88 = arith.mulf %83, %87 : vector<8x128xf32>
    %c5_i32 = arith.constant 5 : i32
    %89 = arith.index_cast %c5_i32 : i32 to index
    %c0_33 = arith.constant 0 : index
    %c0_34 = arith.constant 0 : index
    %90 = vector.load %arg1[%89, %c0_33, %c0_34] : memref<8x8x128xf32, #tpu.memory_space<vmem>>, vector<1x8x128xf32>
    %91 = vector.shape_cast %90 : vector<1x8x128xf32> to vector<8x128xf32>
    %cst_35 = arith.constant dense<0.000000e+00> : vector<8x128xf32>
    %92 = tpu.matmul %88, %0, %cst_35 {dimension_numbers = #tpu.dot_dimension_numbers<[1], [0], [0], [1], [0, 0, 1, 1], [], []>} : vector<8x128xf32>, vector<128x128xf32>, vector<8x128xf32> -> vector<8x128xf32>
    %93 = arith.addf %91, %92 : vector<8x128xf32>
    %94 = math.tanh %93 : vector<8x128xf32>
    %95 = arith.mulf %3, %94 : vector<8x128xf32>
    %96 = arith.addf %95, %6 : vector<8x128xf32>
    %c96_i32_36 = arith.constant 96 : i32
    %97 = tpu.dynamic_rotate %96 by %c96_i32_36 dim 1 : vector<8x128xf32>, i32 -> vector<8x128xf32>
    %c64_i32_37 = arith.constant 64 : i32
    %98 = tpu.dynamic_rotate %96 by %c64_i32_37 dim 1 : vector<8x128xf32>, i32 -> vector<8x128xf32>
    %c32_i32_38 = arith.constant 32 : i32
    %99 = tpu.dynamic_rotate %96 by %c32_i32_38 dim 1 : vector<8x128xf32>, i32 -> vector<8x128xf32>
    %100 = arith.mulf %97, %86 : vector<8x128xf32>
    %101 = arith.mulf %96, %98 : vector<8x128xf32>
    %102 = arith.addf %100, %101 : vector<8x128xf32>
    %103 = math.tanh %102 : vector<8x128xf32>
    %104 = arith.mulf %99, %103 : vector<8x128xf32>
    %c6_i32 = arith.constant 6 : i32
    %105 = arith.index_cast %c6_i32 : i32 to index
    %c0_39 = arith.constant 0 : index
    %c0_40 = arith.constant 0 : index
    %106 = vector.load %arg1[%105, %c0_39, %c0_40] : memref<8x8x128xf32, #tpu.memory_space<vmem>>, vector<1x8x128xf32>
    %107 = vector.shape_cast %106 : vector<1x8x128xf32> to vector<8x128xf32>
    %cst_41 = arith.constant dense<0.000000e+00> : vector<8x128xf32>
    %108 = tpu.matmul %104, %0, %cst_41 {dimension_numbers = #tpu.dot_dimension_numbers<[1], [0], [0], [1], [0, 0, 1, 1], [], []>} : vector<8x128xf32>, vector<128x128xf32>, vector<8x128xf32> -> vector<8x128xf32>
    %109 = arith.addf %107, %108 : vector<8x128xf32>
    %110 = math.tanh %109 : vector<8x128xf32>
    %111 = arith.mulf %3, %110 : vector<8x128xf32>
    %112 = arith.addf %111, %6 : vector<8x128xf32>
    %c96_i32_42 = arith.constant 96 : i32
    %113 = tpu.dynamic_rotate %112 by %c96_i32_42 dim 1 : vector<8x128xf32>, i32 -> vector<8x128xf32>
    %c64_i32_43 = arith.constant 64 : i32
    %114 = tpu.dynamic_rotate %112 by %c64_i32_43 dim 1 : vector<8x128xf32>, i32 -> vector<8x128xf32>
    %c32_i32_44 = arith.constant 32 : i32
    %115 = tpu.dynamic_rotate %112 by %c32_i32_44 dim 1 : vector<8x128xf32>, i32 -> vector<8x128xf32>
    %116 = arith.mulf %113, %102 : vector<8x128xf32>
    %117 = arith.mulf %112, %114 : vector<8x128xf32>
    %118 = arith.addf %116, %117 : vector<8x128xf32>
    %119 = math.tanh %118 : vector<8x128xf32>
    %120 = arith.mulf %115, %119 : vector<8x128xf32>
    %c7_i32 = arith.constant 7 : i32
    %121 = arith.index_cast %c7_i32 : i32 to index
    %c0_45 = arith.constant 0 : index
    %c0_46 = arith.constant 0 : index
    %122 = vector.load %arg1[%121, %c0_45, %c0_46] : memref<8x8x128xf32, #tpu.memory_space<vmem>>, vector<1x8x128xf32>
    %123 = vector.shape_cast %122 : vector<1x8x128xf32> to vector<8x128xf32>
    %cst_47 = arith.constant dense<0.000000e+00> : vector<8x128xf32>
    %124 = tpu.matmul %120, %0, %cst_47 {dimension_numbers = #tpu.dot_dimension_numbers<[1], [0], [0], [1], [0, 0, 1, 1], [], []>} : vector<8x128xf32>, vector<128x128xf32>, vector<8x128xf32> -> vector<8x128xf32>
    %125 = arith.addf %123, %124 : vector<8x128xf32>
    %126 = math.tanh %125 : vector<8x128xf32>
    %127 = arith.mulf %3, %126 : vector<8x128xf32>
    %128 = arith.addf %127, %6 : vector<8x128xf32>
    %c96_i32_48 = arith.constant 96 : i32
    %129 = tpu.dynamic_rotate %128 by %c96_i32_48 dim 1 : vector<8x128xf32>, i32 -> vector<8x128xf32>
    %c64_i32_49 = arith.constant 64 : i32
    %130 = tpu.dynamic_rotate %128 by %c64_i32_49 dim 1 : vector<8x128xf32>, i32 -> vector<8x128xf32>
    %c32_i32_50 = arith.constant 32 : i32
    %131 = tpu.dynamic_rotate %128 by %c32_i32_50 dim 1 : vector<8x128xf32>, i32 -> vector<8x128xf32>
    %132 = arith.mulf %129, %118 : vector<8x128xf32>
    %133 = arith.mulf %128, %130 : vector<8x128xf32>
    %134 = arith.addf %132, %133 : vector<8x128xf32>
    %135 = math.tanh %134 : vector<8x128xf32>
    %136 = arith.mulf %131, %135 : vector<8x128xf32>
    %c8_i32 = arith.constant 8 : i32
    %c0_51 = arith.constant 0 : index
    %c0_52 = arith.constant 0 : index
    %137 = vector.load %arg5[%c0_51, %c0_52] : memref<128x128xf32, #tpu.memory_space<vmem>>, vector<128x128xf32>
    %cst_53 = arith.constant dense<0.000000e+00> : vector<8x128xf32>
    %138 = tpu.matmul %136, %137, %cst_53 {dimension_numbers = #tpu.dot_dimension_numbers<[1], [0], [0], [1], [0, 0, 1, 1], [], []>} : vector<8x128xf32>, vector<128x128xf32>, vector<8x128xf32> -> vector<8x128xf32>
    %c0_54 = arith.constant 0 : index
    %c0_55 = arith.constant 0 : index
    %139 = vector.load %arg6[%c0_54, %c0_55] : memref<1x128xf32, #tpu.memory_space<vmem>>, vector<1x128xf32>
    %140 = vector.broadcast %139 : vector<1x128xf32> to vector<8x128xf32>
    %141 = arith.addf %138, %140 : vector<8x128xf32>
    %142 = tpu.iota {dimensions = array<i32: 1>} : vector<8x128xi32>
    %c3_i32_56 = arith.constant 3 : i32
    %143 = vector.broadcast %c3_i32_56 : i32 to vector<8x128xi32>
    %144 = arith.cmpi slt, %142, %143 : vector<8x128xi32>
    %cst_57 = arith.constant -1.000000e+30 : f32
    %145 = vector.broadcast %cst_57 : f32 to vector<8x128xf32>
    %146 = arith.select %144, %141, %145 : vector<8x128xi1>, vector<8x128xf32>
    %cst_58 = arith.constant dense<0xFF800000> : vector<8xf32>
    %147 = vector.multi_reduction <maximumf>, %146, %cst_58 [1] : vector<8x128xf32> to vector<8xf32>
    %148 = vector.shape_cast %147 : vector<8xf32> to vector<8x1xf32>
    %149 = vector.broadcast %148 : vector<8x1xf32> to vector<8x128xf32>
    %150 = arith.subf %146, %149 : vector<8x128xf32>
    %151 = math.exp %150 : vector<8x128xf32>
    %cst_59 = arith.constant 0.000000e+00 : f32
    %152 = vector.broadcast %cst_59 : f32 to vector<8x128xf32>
    %153 = arith.select %144, %151, %152 : vector<8x128xi1>, vector<8x128xf32>
    %cst_60 = arith.constant dense<0.000000e+00> : vector<8xf32>
    %154 = vector.multi_reduction <add>, %153, %cst_60 [1] : vector<8x128xf32> to vector<8xf32>
    %155 = vector.shape_cast %154 : vector<8xf32> to vector<8x1xf32>
    %156 = vector.broadcast %155 : vector<8x1xf32> to vector<8x128xf32>
    %157 = arith.divf %153, %156 : vector<8x128xf32>
    %c0_61 = arith.constant 0 : index
    %c0_62 = arith.constant 0 : index
    %158 = vector.load %arg7[%c0_61, %c0_62] : memref<8x128xf32, #tpu.memory_space<vmem>>, vector<8x128xf32>
    tpu.vector_store %arg7[%c0_61, %c0_62], %157 {strides = array<i32>} : memref<8x128xf32, #tpu.memory_space<vmem>>, vector<8x128xf32>,
    return
  }
  func.func @transform_0(%arg0: i32) -> (i32, i32, i32) {
    %c0_i32 = arith.constant 0 : i32
    %c0_i32_0 = arith.constant 0 : i32
    %c0_i32_1 = arith.constant 0 : i32
    return %c0_i32, %arg0, %c0_i32_0 : i32, i32, i32
  }
  func.func @transform_1(%arg0: i32) -> (i32, i32) {
    %c0_i32 = arith.constant 0 : i32
    %c0_i32_0 = arith.constant 0 : i32
    %c0_i32_1 = arith.constant 0 : i32
    return %c0_i32, %c0_i32_0 : i32, i32
  }
  func.func @transform_2(%arg0: i32) -> (i32, i32) {
    %c0_i32 = arith.constant 0 : i32
    %c0_i32_0 = arith.constant 0 : i32
    %c0_i32_1 = arith.constant 0 : i32
    return %c0_i32, %c0_i32_0 : i32, i32
  }
  func.func @transform_3(%arg0: i32) -> (i32, i32) {
    %c0_i32 = arith.constant 0 : i32
    %c0_i32_0 = arith.constant 0 : i32
    %c0_i32_1 = arith.constant 0 : i32
    return %c0_i32, %c0_i32_0 : i32, i32
  }
  func.func @transform_4(%arg0: i32) -> (i32, i32) {
    %c0_i32 = arith.constant 0 : i32
    %c0_i32_0 = arith.constant 0 : i32
    %c0_i32_1 = arith.constant 0 : i32
    return %c0_i32, %c0_i32_0 : i32, i32
  }
  func.func @transform_5(%arg0: i32) -> (i32, i32) {
    %c0_i32 = arith.constant 0 : i32
    %c0_i32_0 = arith.constant 0 : i32
    %c0_i32_1 = arith.constant 0 : i32
    return %c0_i32, %c0_i32_0 : i32, i32
  }
  func.func @transform_6(%arg0: i32) -> (i32, i32) {
    %c0_i32 = arith.constant 0 : i32
    %c0_i32_0 = arith.constant 0 : i32
    return %arg0, %c0_i32 : i32, i32
  }
}

</mosaic_0001>

<llo_original>
// kernel: tpu_custom_call.1
$region0: #{tpu_custom_call.1}
  #allocation0 [shape = 'u32[]', space=smem, size = 0x4, offset = 0x4, fixed_abs, tag = 'smem constant byte address 0x4 - core index']
  #allocation1 [shape = 'u32[144,128]{1,0:T(1,128)}', space=vmem, size = 0x12000, scoped, tag = 'internal scratch']
  %s0 = inlined_call_operand.hbm [shape: f32[8,8,128], index: 0, kind: input, shape index: {}]
  %s1 = inlined_call_operand.hbm [shape: f32[128,128], index: 1, kind: input, shape index: {}]
  %s2 = inlined_call_operand.vmem [shape: f32[1,128], index: 2, kind: input, shape index: {}]
  %s3 = inlined_call_operand.vmem [shape: f32[1,128], index: 3, kind: input, shape index: {}]
  %s4 = inlined_call_operand.hbm [shape: f32[128,128], index: 4, kind: input, shape index: {}]
  %s5 = inlined_call_operand.vmem [shape: f32[1,128], index: 5, kind: input, shape index: {}]
  %s6 = inlined_call_operand.hbm [shape: f32[8,128], index: 6, kind: output, shape index: {}]
  %s7 = sld [smem:[#allocation0]]
  $region46: #{tpu_custom_call.1} parent=0
    _
  %s9 = ssub.s32 1, %s7
  %s10 = scalar_select 0, %s9, %s7
  $region1: #{tpu_custom_call.1} parent=0
    #allocation2 [shape = 'u8[32768]{0}', space=vmem, size = 0x8000, scoped, tag = 'input window, operand 0, single buffered']
    #allocation3 [shape = 's32[1]{0}', space=sflag, size = 0x4, scoped, tag = 'scoped memory for tpu_custom_call.1']
    #allocation4 [shape = 's32[1]{0}', space=sflag, size = 0x4, scoped, tag = 'scoped memory for tpu_custom_call.1']
    #allocation5 [shape = 'u8[65536]{0}', space=vmem, size = 0x10000, scoped, tag = 'input window, operand 1, single buffered']
    #allocation6 [shape = 's32[1]{0}', space=sflag, size = 0x4, scoped, tag = 'scoped memory for tpu_custom_call.1']
    #allocation7 [shape = 'u8[65536]{0}', space=vmem, size = 0x10000, scoped, tag = 'input window, operand 4, single buffered']
    #allocation8 [shape = 'u8[4096]{0}', space=vmem, size = 0x1000, scoped, tag = 'output window, operand 0, single buffered']
    %11 = vsyncpa [#allocation3], 0
    %12 = vsyncpa [#allocation6], 0
    %13 = vsyncpa [#allocation4], 0
    // Predicated region
    $region2: #{tpu_custom_call.1} parent=1 // pred_check
      _
    $region3: #{tpu_custom_call.1} parent=1 // pred_check_branch
      %15 = sbr.rel (0) target = $region5
    $region4: #{tpu_custom_call.1} parent=1 // pred_region
      %s17 = ssub.s32 1024, 1024
      %18 = vsyncadd [#allocation3], %s17
      %s19 = sshll.u32 [#allocation2], 4
      %s20 = int_to_ptr.vmem [resolvable:$true] %s19
      %25 = dma.hbm_to_vmem [thread:$0]  %s0, 1024, %s20, [#allocation3], 128, 128, 8
    $region5: #{tpu_custom_call.1} parent=1 // pred_fallthru
      _
    // Predicated region
    $region6: #{tpu_custom_call.1} parent=1 // pred_check
      _
    $region7: #{tpu_custom_call.1} parent=1 // pred_check_branch
      %27 = sbr.rel (0) target = $region9
    $region8: #{tpu_custom_call.1} parent=1 // pred_region
      %s29 = ssub.s32 2048, 2048
      %30 = vsyncadd [#allocation6], %s29
      %s31 = sshll.u32 [#allocation5], 4
      %s32 = int_to_ptr.vmem [resolvable:$true] %s31
      %37 = dma.hbm_to_vmem [thread:$0]  %s1, 2048, %s32, [#allocation6], 128, 128, 8
    $region9: #{tpu_custom_call.1} parent=1 // pred_fallthru
      _
    // Predicated region
    $region10: #{tpu_custom_call.1} parent=1 // pred_check
      _
    $region11: #{tpu_custom_call.1} parent=1 // pred_check_branch
      %39 = sbr.rel (0) target = $region13
    $region12: #{tpu_custom_call.1} parent=1 // pred_region
      _
    $region13: #{tpu_custom_call.1} parent=1 // pred_fallthru
      _
    // Predicated region
    $region14: #{tpu_custom_call.1} parent=1 // pred_check
      _
    $region15: #{tpu_custom_call.1} parent=1 // pred_check_branch
      %41 = sbr.rel (0) target = $region17
    $region16: #{tpu_custom_call.1} parent=1 // pred_region
      _
    $region17: #{tpu_custom_call.1} parent=1 // pred_fallthru
      _
    // Predicated region
    $region18: #{tpu_custom_call.1} parent=1 // pred_check
      _
    $region19: #{tpu_custom_call.1} parent=1 // pred_check_branch
      %43 = sbr.rel (0) target = $region21
    $region20: #{tpu_custom_call.1} parent=1 // pred_region
      %s45 = ssub.s32 2048, 2048
      %46 = vsyncadd [#allocation6], %s45
      %s47 = sshll.u32 [#allocation7], 4
      %s48 = int_to_ptr.vmem [resolvable:$true] %s47
      %53 = dma.hbm_to_vmem [thread:$0]  %s4, 2048, %s48, [#allocation6], 128, 128, 8
    $region21: #{tpu_custom_call.1} parent=1 // pred_fallthru
      _
    // Predicated region
    $region22: #{tpu_custom_call.1} parent=1 // pred_check
      _
    $region23: #{tpu_custom_call.1} parent=1 // pred_check_branch
      %55 = sbr.rel (0) target = $region25
    $region24: #{tpu_custom_call.1} parent=1 // pred_region
      _
    $region25: #{tpu_custom_call.1} parent=1 // pred_fallthru
      _
    // Predicated region
    $region26: #{tpu_custom_call.1} parent=1 // pred_check
      _
    $region27: #{tpu_custom_call.1} parent=1 // pred_check_branch
      %57 = sbr.rel (0) target = $region29
    $region28: #{tpu_custom_call.1} parent=1 // pred_region
      %58 = dma.done [#allocation3], 1024
    $region29: #{tpu_custom_call.1} parent=1 // pred_fallthru
      _
    // Predicated region
    $region30: #{tpu_custom_call.1} parent=1 // pred_check
      _
    $region31: #{tpu_custom_call.1} parent=1 // pred_check_branch
      %60 = sbr.rel (0) target = $region33
    $region32: #{tpu_custom_call.1} parent=1 // pred_region
      %61 = dma.done [#allocation6], 2048
    $region33: #{tpu_custom_call.1} parent=1 // pred_fallthru
      _
    // Predicated region
    $region34: #{tpu_custom_call.1} parent=1 // pred_check
      _
    $region35: #{tpu_custom_call.1} parent=1 // pred_check_branch
      %63 = sbr.rel (0) target = $region37
    $region36: #{tpu_custom_call.1} parent=1 // pred_region
      %64 = dma.done [#allocation6], 2048
    $region37: #{tpu_custom_call.1} parent=1 // pred_fallthru
      _
    %v65 = vld [vmem:[#allocation5] sm:$0xff]
    %v66 = vld [vmem:[#allocation5 + $0x8] sm:$0xff]
    %v67 = vld [vmem:[#allocation5 + $0x10] sm:$0xff]
    %v68 = vld [vmem:[#allocation5 + $0x18] sm:$0xff]
    %v69 = vld [vmem:[#allocation5 + $0x20] sm:$0xff]
    %v70 = vld [vmem:[#allocation5 + $0x28] sm:$0xff]
    %v71 = vld [vmem:[#allocation5 + $0x30] sm:$0xff]
    %v72 = vld [vmem:[#allocation5 + $0x38] sm:$0xff]
    %v73 = vld [vmem:[#allocation5 + $0x40] sm:$0xff]
    %v74 = vld [vmem:[#allocation5 + $0x48] sm:$0xff]
    %v75 = vld [vmem:[#allocation5 + $0x50] sm:$0xff]
    %v76 = vld [vmem:[#allocation5 + $0x58] sm:$0xff]
    %v77 = vld [vmem:[#allocation5 + $0x60] sm:$0xff]
    %v78 = vld [vmem:[#allocation5 + $0x68] sm:$0xff]
    %v79 = vld [vmem:[#allocation5 + $0x70] sm:$0xff]
    %v80 = vld [vmem:[#allocation5 + $0x78] sm:$0xff]
    %v81 = vld [vmem:[%s2] sm:$0x1]
    %v83 = vlaneseq
    %v84 = vshrl.u32 %v83, 7
    %v85 = vsub.s32 0, %v84
    %v86 = vrot.slane %v81, %v85
    %v88 = vld [vmem:[%s3] sm:$0x1]
    %v90 = vlaneseq
    %v91 = vshrl.u32 %v90, 7
    %v92 = vsub.s32 0, %v91
    %v93 = vrot.slane %v88, %v92
    %v95 = vld [vmem:[#allocation2] sm:$0xff]
    %96 = vmatprep.subr.mxu0 0.0
    %97 = vmatpush1.msra.mxu0 %v80
    %98 = vmatprep.subr.mxu0 0.0
    %99 = vmatpush1.msra.mxu0 %v79
    %100 = vmatprep.subr.mxu0 0.0
    %101 = vmatpush1.msra.mxu0 %v78
    %102 = vmatprep.subr.mxu0 0.0
    %103 = vmatpush1.msra.mxu0 %v77
    %104 = vmatprep.subr.mxu0 0.0
    %105 = vmatpush1.msra.mxu0 %v76
    %106 = vmatprep.subr.mxu0 0.0
    %107 = vmatpush1.msra.mxu0 %v75
    %108 = vmatprep.subr.mxu0 0.0
    %109 = vmatpush1.msra.mxu0 %v74
    %110 = vmatprep.subr.mxu0 0.0
    %111 = vmatpush1.msra.mxu0 %v73
    %112 = vmatprep.subr.mxu0 0.0
    %113 = vmatpush1.msra.mxu0 %v72
    %114 = vmatprep.subr.mxu0 0.0
    %115 = vmatpush1.msra.mxu0 %v71
    %116 = vmatprep.subr.mxu0 0.0
    %117 = vmatpush1.msra.mxu0 %v70
    %118 = vmatprep.subr.mxu0 0.0
    %119 = vmatpush1.msra.mxu0 %v69
    %120 = vmatprep.subr.mxu0 0.0
    %121 = vmatpush1.msra.mxu0 %v68
    %122 = vmatprep.subr.mxu0 0.0
    %123 = vmatpush1.msra.mxu0 %v67
    %124 = vmatprep.subr.mxu0 0.0
    %125 = vmatpush1.msra.mxu0 %v66
    %126 = vmatprep.subr.mxu0 0.0
    %127 = vmatpush1.msra.mxu0 %v65
    %128 = vmatprep.subr.mxu0 0.0
    %129 = vmatpush2.msra.mxu0 0.0
    %130 = vmatprep.subr.mxu0 0.0
    %131 = vmatpush2.msra.mxu0 0.0
    %132 = vmatprep.subr.mxu0 0.0
    %133 = vmatpush2.msra.mxu0 0.0
    %134 = vmatprep.subr.mxu0 0.0
    %135 = vmatpush2.msra.mxu0 0.0
    %136 = vmatprep.subr.mxu0 0.0
    %137 = vmatpush2.msra.mxu0 0.0
    %138 = vmatprep.subr.mxu0 0.0
    %139 = vmatpush2.msra.mxu0 0.0
    %140 = vmatprep.subr.mxu0 0.0
    %141 = vmatpush2.msra.mxu0 0.0
    %142 = vmatprep.subr.mxu0 0.0
    %143 = vmatpush2.msra.mxu0 0.0
    %144 = vmatprep.subr.mxu0 0.0
    %145 = vmatpush2.msra.mxu0 0.0
    %146 = vmatprep.subr.mxu0 0.0
    %147 = vmatpush2.msra.mxu0 0.0
    %148 = vmatprep.subr.mxu0 0.0
    %149 = vmatpush2.msra.mxu0 0.0
    %150 = vmatprep.subr.mxu0 0.0
    %151 = vmatpush2.msra.mxu0 0.0
    %152 = vmatprep.subr.mxu0 0.0
    %153 = vmatpush2.msra.mxu0 0.0
    %154 = vmatprep.subr.mxu0 0.0
    %155 = vmatpush2.msra.mxu0 0.0
    %156 = vmatprep.subr.mxu0 0.0
    %157 = vmatpush2.msra.mxu0 0.0
    %158 = vmatprep.subr.mxu0 0.0
    %159 = vmatpush2.msra.mxu0 0.0
    %160 = vmatprep.mubr.f32.mxu0 0.0
    %161 = vmatmul.mubr.f32.gmra.mxu0 0.0
    %v162 = vpop.f32.mrf.mxu0
    %v163 = vadd.f32 0.0, %v162
    %v164 = vpop.f32.mrf.mxu0
    %165 = vdwg.mxu0
    %v166 = vadd.f32 %v95, %v163
    %v167 = vtanh.pop %v166
    %v168 = vmul.f32 %v86, %v167
    %v169 = vadd.f32 %v168, %v93
    %170 = vrot.lane.b32.xlu0 %v169, 96
    %v171 = vpop.permute.xlu0 %170
    %172 = vrot.lane.b32.xlu0 %v169, 64
    %v173 = vpop.permute.xlu0 %172
    %174 = vrot.lane.b32.xlu0 %v169, 32
    %v175 = vpop.permute.xlu0 %174
    %v176 = vmul.f32 %v171, 0.0
    %v177 = vmul.f32 %v169, %v173
    %v178 = vadd.f32 %v176, %v177
    %v179 = vtanh.pop %v178
    %v180 = vmul.f32 %v175, %v179
    %s181 = scalar_lea.vmem [#allocation2], 8
    %v182 = vld [vmem:[%s181] sm:$0xff]
    %183 = vmatprep.subr.mxu0 0.0
    %184 = vmatpush1.msra.mxu0 %v80
    %185 = vmatprep.subr.mxu0 0.0
    %186 = vmatpush1.msra.mxu0 %v79
    %187 = vmatprep.subr.mxu0 0.0
    %188 = vmatpush1.msra.mxu0 %v78
    %189 = vmatprep.subr.mxu0 0.0
    %190 = vmatpush1.msra.mxu0 %v77
    %191 = vmatprep.subr.mxu0 0.0
    %192 = vmatpush1.msra.mxu0 %v76
    %193 = vmatprep.subr.mxu0 0.0
    %194 = vmatpush1.msra.mxu0 %v75
    %195 = vmatprep.subr.mxu0 0.0
    %196 = vmatpush1.msra.mxu0 %v74
    %197 = vmatprep.subr.mxu0 0.0
    %198 = vmatpush1.msra.mxu0 %v73
    %199 = vmatprep.subr.mxu0 0.0
    %200 = vmatpush1.msra.mxu0 %v72
    %201 = vmatprep.subr.mxu0 0.0
    %202 = vmatpush1.msra.mxu0 %v71
    %203 = vmatprep.subr.mxu0 0.0
    %204 = vmatpush1.msra.mxu0 %v70
    %205 = vmatprep.subr.mxu0 0.0
    %206 = vmatpush1.msra.mxu0 %v69
    %207 = vmatprep.subr.mxu0 0.0
    %208 = vmatpush1.msra.mxu0 %v68
    %209 = vmatprep.subr.mxu0 0.0
    %210 = vmatpush1.msra.mxu0 %v67
    %211 = vmatprep.subr.mxu0 0.0
    %212 = vmatpush1.msra.mxu0 %v66
    %213 = vmatprep.subr.mxu0 0.0
    %214 = vmatpush1.msra.mxu0 %v65
    %215 = vmatprep.subr.mxu0 0.0
    %216 = vmatpush2.msra.mxu0 0.0
    %217 = vmatprep.subr.mxu0 0.0
    %218 = vmatpush2.msra.mxu0 0.0
    %219 = vmatprep.subr.mxu0 0.0
    %220 = vmatpush2.msra.mxu0 0.0
    %221 = vmatprep.subr.mxu0 0.0
    %222 = vmatpush2.msra.mxu0 0.0
    %223 = vmatprep.subr.mxu0 0.0
    %224 = vmatpush2.msra.mxu0 0.0
    %225 = vmatprep.subr.mxu0 0.0
    %226 = vmatpush2.msra.mxu0 0.0
    %227 = vmatprep.subr.mxu0 0.0
    %228 = vmatpush2.msra.mxu0 0.0
    %229 = vmatprep.subr.mxu0 0.0
    %230 = vmatpush2.msra.mxu0 0.0
    %231 = vmatprep.subr.mxu0 0.0
    %232 = vmatpush2.msra.mxu0 0.0
    %233 = vmatprep.subr.mxu0 0.0
    %234 = vmatpush2.msra.mxu0 0.0
    %235 = vmatprep.subr.mxu0 0.0
    %236 = vmatpush2.msra.mxu0 0.0
    %237 = vmatprep.subr.mxu0 0.0
    %238 = vmatpush2.msra.mxu0 0.0
    %239 = vmatprep.subr.mxu0 0.0
    %240 = vmatpush2.msra.mxu0 0.0
    %241 = vmatprep.subr.mxu0 0.0
    %242 = vmatpush2.msra.mxu0 0.0
    %243 = vmatprep.subr.mxu0 0.0
    %244 = vmatpush2.msra.mxu0 0.0
    %245 = vmatprep.subr.mxu0 0.0
    %246 = vmatpush2.msra.mxu0 0.0
    %247 = vmatprep.mubr.f32.mxu0 0.0
    %248 = vmatmul.mubr.f32.gmra.mxu0 %v180
    %v249 = vpop.f32.mrf.mxu0
    %v250 = vadd.f32 0.0, %v249
    %v251 = vpop.f32.mrf.mxu0
    %252 = vdwg.mxu0
    %v253 = vadd.f32 %v182, %v250
    %v254 = vtanh.pop %v253
    %v255 = vmul.f32 %v86, %v254
    %v256 = vadd.f32 %v255, %v93
    %257 = vrot.lane.b32.xlu0 %v256, 96
    %v258 = vpop.permute.xlu0 %257
    %259 = vrot.lane.b32.xlu0 %v256, 64
    %v260 = vpop.permute.xlu0 %259
    %261 = vrot.lane.b32.xlu0 %v256, 32
    %v262 = vpop.permute.xlu0 %261
    %v263 = vmul.f32 %v258, %v178
    %v264 = vmul.f32 %v256, %v260
    %v265 = vadd.f32 %v263, %v264
    %v266 = vtanh.pop %v265
    %v267 = vmul.f32 %v262, %v266
    %s268 = scalar_lea.vmem [#allocation2], 16
    %v269 = vld [vmem:[%s268] sm:$0xff]
    %270 = vmatprep.subr.mxu0 0.0
    %271 = vmatpush1.msra.mxu0 %v80
    %272 = vmatprep.subr.mxu0 0.0
    %273 = vmatpush1.msra.mxu0 %v79
    %274 = vmatprep.subr.mxu0 0.0
    %275 = vmatpush1.msra.mxu0 %v78
    %276 = vmatprep.subr.mxu0 0.0
    %277 = vmatpush1.msra.mxu0 %v77
    %278 = vmatprep.subr.mxu0 0.0
    %279 = vmatpush1.msra.mxu0 %v76
    %280 = vmatprep.subr.mxu0 0.0
    %281 = vmatpush1.msra.mxu0 %v75
    %282 = vmatprep.subr.mxu0 0.0
    %283 = vmatpush1.msra.mxu0 %v74
    %284 = vmatprep.subr.mxu0 0.0
    %285 = vmatpush1.msra.mxu0 %v73
    %286 = vmatprep.subr.mxu0 0.0
    %287 = vmatpush1.msra.mxu0 %v72
    %288 = vmatprep.subr.mxu0 0.0
    %289 = vmatpush1.msra.mxu0 %v71
    %290 = vmatprep.subr.mxu0 0.0
    %291 = vmatpush1.msra.mxu0 %v70
    %292 = vmatprep.subr.mxu0 0.0
    %293 = vmatpush1.msra.mxu0 %v69
    %294 = vmatprep.subr.mxu0 0.0
    %295 = vmatpush1.msra.mxu0 %v68
    %296 = vmatprep.subr.mxu0 0.0
    %297 = vmatpush1.msra.mxu0 %v67
    %298 = vmatprep.subr.mxu0 0.0
    %299 = vmatpush1.msra.mxu0 %v66
    %300 = vmatprep.subr.mxu0 0.0
    %301 = vmatpush1.msra.mxu0 %v65
    %302 = vmatprep.subr.mxu0 0.0
    %303 = vmatpush2.msra.mxu0 0.0
    %304 = vmatprep.subr.mxu0 0.0
    %305 = vmatpush2.msra.mxu0 0.0
    %306 = vmatprep.subr.mxu0 0.0
    %307 = vmatpush2.msra.mxu0 0.0
    %308 = vmatprep.subr.mxu0 0.0
    %309 = vmatpush2.msra.mxu0 0.0
    %310 = vmatprep.subr.mxu0 0.0
    %311 = vmatpush2.msra.mxu0 0.0
    %312 = vmatprep.subr.mxu0 0.0
    %313 = vmatpush2.msra.mxu0 0.0
    %314 = vmatprep.subr.mxu0 0.0
    %315 = vmatpush2.msra.mxu0 0.0
    %316 = vmatprep.subr.mxu0 0.0
    %317 = vmatpush2.msra.mxu0 0.0
    %318 = vmatprep.subr.mxu0 0.0
    %319 = vmatpush2.msra.mxu0 0.0
    %320 = vmatprep.subr.mxu0 0.0
    %321 = vmatpush2.msra.mxu0 0.0
    %322 = vmatprep.subr.mxu0 0.0
    %323 = vmatpush2.msra.mxu0 0.0
    %324 = vmatprep.subr.mxu0 0.0
    %325 = vmatpush2.msra.mxu0 0.0
    %326 = vmatprep.subr.mxu0 0.0
    %327 = vmatpush2.msra.mxu0 0.0
    %328 = vmatprep.subr.mxu0 0.0
    %329 = vmatpush2.msra.mxu0 0.0
    %330 = vmatprep.subr.mxu0 0.0
    %331 = vmatpush2.msra.mxu0 0.0
    %332 = vmatprep.subr.mxu0 0.0
    %333 = vmatpush2.msra.mxu0 0.0
    %334 = vmatprep.mubr.f32.mxu0 0.0
    %335 = vmatmul.mubr.f32.gmra.mxu0 %v267
    %v336 = vpop.f32.mrf.mxu0
    %v337 = vadd.f32 0.0, %v336
    %v338 = vpop.f32.mrf.mxu0
    %339 = vdwg.mxu0
    %v340 = vadd.f32 %v269, %v337
    %v341 = vtanh.pop %v340
    %v342 = vmul.f32 %v86, %v341
    %v343 = vadd.f32 %v342, %v93
    %344 = vrot.lane.b32.xlu0 %v343, 96
    %v345 = vpop.permute.xlu0 %344
    %346 = vrot.lane.b32.xlu0 %v343, 64
    %v347 = vpop.permute.xlu0 %346
    %348 = vrot.lane.b32.xlu0 %v343, 32
    %v349 = vpop.permute.xlu0 %348
    %v350 = vmul.f32 %v345, %v265
    %v351 = vmul.f32 %v343, %v347
    %v352 = vadd.f32 %v350, %v351
    %v353 = vtanh.pop %v352
    %v354 = vmul.f32 %v349, %v353
    %s355 = scalar_lea.vmem [#allocation2], 24
    %v356 = vld [vmem:[%s355] sm:$0xff]
    %357 = vmatprep.subr.mxu0 0.0
    %358 = vmatpush1.msra.mxu0 %v80
    %359 = vmatprep.subr.mxu0 0.0
    %360 = vmatpush1.msra.mxu0 %v79
    %361 = vmatprep.subr.mxu0 0.0
    %362 = vmatpush1.msra.mxu0 %v78
    %363 = vmatprep.subr.mxu0 0.0
    %364 = vmatpush1.msra.mxu0 %v77
    %365 = vmatprep.subr.mxu0 0.0
    %366 = vmatpush1.msra.mxu0 %v76
    %367 = vmatprep.subr.mxu0 0.0
    %368 = vmatpush1.msra.mxu0 %v75
    %369 = vmatprep.subr.mxu0 0.0
    %370 = vmatpush1.msra.mxu0 %v74
    %371 = vmatprep.subr.mxu0 0.0
    %372 = vmatpush1.msra.mxu0 %v73
    %373 = vmatprep.subr.mxu0 0.0
    %374 = vmatpush1.msra.mxu0 %v72
    %375 = vmatprep.subr.mxu0 0.0
    %376 = vmatpush1.msra.mxu0 %v71
    %377 = vmatprep.subr.mxu0 0.0
    %378 = vmatpush1.msra.mxu0 %v70
    %379 = vmatprep.subr.mxu0 0.0
    %380 = vmatpush1.msra.mxu0 %v69
    %381 = vmatprep.subr.mxu0 0.0
    %382 = vmatpush1.msra.mxu0 %v68
    %383 = vmatprep.subr.mxu0 0.0
    %384 = vmatpush1.msra.mxu0 %v67
    %385 = vmatprep.subr.mxu0 0.0
    %386 = vmatpush1.msra.mxu0 %v66
    %387 = vmatprep.subr.mxu0 0.0
    %388 = vmatpush1.msra.mxu0 %v65
    %389 = vmatprep.subr.mxu0 0.0
    %390 = vmatpush2.msra.mxu0 0.0
    %391 = vmatprep.subr.mxu0 0.0
    %392 = vmatpush2.msra.mxu0 0.0
    %393 = vmatprep.subr.mxu0 0.0
    %394 = vmatpush2.msra.mxu0 0.0
    %395 = vmatprep.subr.mxu0 0.0
    %396 = vmatpush2.msra.mxu0 0.0
    %397 = vmatprep.subr.mxu0 0.0
    %398 = vmatpush2.msra.mxu0 0.0
    %399 = vmatprep.subr.mxu0 0.0
    %400 = vmatpush2.msra.mxu0 0.0
    %401 = vmatprep.subr.mxu0 0.0
    %402 = vmatpush2.msra.mxu0 0.0
    %403 = vmatprep.subr.mxu0 0.0
    %404 = vmatpush2.msra.mxu0 0.0
    %405 = vmatprep.subr.mxu0 0.0
    %406 = vmatpush2.msra.mxu0 0.0
    %407 = vmatprep.subr.mxu0 0.0
    %408 = vmatpush2.msra.mxu0 0.0
    %409 = vmatprep.subr.mxu0 0.0
    %410 = vmatpush2.msra.mxu0 0.0
    %411 = vmatprep.subr.mxu0 0.0
    %412 = vmatpush2.msra.mxu0 0.0
    %413 = vmatprep.subr.mxu0 0.0
    %414 = vmatpush2.msra.mxu0 0.0
    %415 = vmatprep.subr.mxu0 0.0
    %416 = vmatpush2.msra.mxu0 0.0
    %417 = vmatprep.subr.mxu0 0.0
    %418 = vmatpush2.msra.mxu0 0.0
    %419 = vmatprep.subr.mxu0 0.0
    %420 = vmatpush2.msra.mxu0 0.0
    %421 = vmatprep.mubr.f32.mxu0 0.0
    %422 = vmatmul.mubr.f32.gmra.mxu0 %v354
    %v423 = vpop.f32.mrf.mxu0
    %v424 = vadd.f32 0.0, %v423
    %v425 = vpop.f32.mrf.mxu0
    %426 = vdwg.mxu0
    %v427 = vadd.f32 %v356, %v424
    %v428 = vtanh.pop %v427
    %v429 = vmul.f32 %v86, %v428
    %v430 = vadd.f32 %v429, %v93
    %431 = vrot.lane.b32.xlu0 %v430, 96
    %v432 = vpop.permute.xlu0 %431
    %433 = vrot.lane.b32.xlu0 %v430, 64
    %v434 = vpop.permute.xlu0 %433
    %435 = vrot.lane.b32.xlu0 %v430, 32
    %v436 = vpop.permute.xlu0 %435
    %v437 = vmul.f32 %v432, %v352
    %v438 = vmul.f32 %v430, %v434
    %v439 = vadd.f32 %v437, %v438
    %v440 = vtanh.pop %v439
    %v441 = vmul.f32 %v436, %v440
    %s442 = scalar_lea.vmem [#allocation2], 32
    %v443 = vld [vmem:[%s442] sm:$0xff]
    %444 = vmatprep.subr.mxu0 0.0
    %445 = vmatpush1.msra.mxu0 %v80
    %446 = vmatprep.subr.mxu0 0.0
    %447 = vmatpush1.msra.mxu0 %v79
    %448 = vmatprep.subr.mxu0 0.0
    %449 = vmatpush1.msra.mxu0 %v78
    %450 = vmatprep.subr.mxu0 0.0
    %451 = vmatpush1.msra.mxu0 %v77
    %452 = vmatprep.subr.mxu0 0.0
    %453 = vmatpush1.msra.mxu0 %v76
    %454 = vmatprep.subr.mxu0 0.0
    %455 = vmatpush1.msra.mxu0 %v75
    %456 = vmatprep.subr.mxu0 0.0
    %457 = vmatpush1.msra.mxu0 %v74
    %458 = vmatprep.subr.mxu0 0.0
    %459 = vmatpush1.msra.mxu0 %v73
    %460 = vmatprep.subr.mxu0 0.0
    %461 = vmatpush1.msra.mxu0 %v72
    %462 = vmatprep.subr.mxu0 0.0
    %463 = vmatpush1.msra.mxu0 %v71
    %464 = vmatprep.subr.mxu0 0.0
    %465 = vmatpush1.msra.mxu0 %v70
    %466 = vmatprep.subr.mxu0 0.0
    %467 = vmatpush1.msra.mxu0 %v69
    %468 = vmatprep.subr.mxu0 0.0
    %469 = vmatpush1.msra.mxu0 %v68
    %470 = vmatprep.subr.mxu0 0.0
    %471 = vmatpush1.msra.mxu0 %v67
    %472 = vmatprep.subr.mxu0 0.0
    %473 = vmatpush1.msra.mxu0 %v66
    %474 = vmatprep.subr.mxu0 0.0
    %475 = vmatpush1.msra.mxu0 %v65
    %476 = vmatprep.subr.mxu0 0.0
    %477 = vmatpush2.msra.mxu0 0.0
    %478 = vmatprep.subr.mxu0 0.0
    %479 = vmatpush2.msra.mxu0 0.0
    %480 = vmatprep.subr.mxu0 0.0
    %481 = vmatpush2.msra.mxu0 0.0
    %482 = vmatprep.subr.mxu0 0.0
    %483 = vmatpush2.msra.mxu0 0.0
    %484 = vmatprep.subr.mxu0 0.0
    %485 = vmatpush2.msra.mxu0 0.0
    %486 = vmatprep.subr.mxu0 0.0
    %487 = vmatpush2.msra.mxu0 0.0
    %488 = vmatprep.subr.mxu0 0.0
    %489 = vmatpush2.msra.mxu0 0.0
    %490 = vmatprep.subr.mxu0 0.0
    %491 = vmatpush2.msra.mxu0 0.0
    %492 = vmatprep.subr.mxu0 0.0
    %493 = vmatpush2.msra.mxu0 0.0
    %494 = vmatprep.subr.mxu0 0.0
    %495 = vmatpush2.msra.mxu0 0.0
    %496 = vmatprep.subr.mxu0 0.0
    %497 = vmatpush2.msra.mxu0 0.0
    %498 = vmatprep.subr.mxu0 0.0
    %499 = vmatpush2.msra.mxu0 0.0
    %500 = vmatprep.subr.mxu0 0.0
    %501 = vmatpush2.msra.mxu0 0.0
    %502 = vmatprep.subr.mxu0 0.0
    %503 = vmatpush2.msra.mxu0 0.0
    %504 = vmatprep.subr.mxu0 0.0
    %505 = vmatpush2.msra.mxu0 0.0
    %506 = vmatprep.subr.mxu0 0.0
    %507 = vmatpush2.msra.mxu0 0.0
    %508 = vmatprep.mubr.f32.mxu0 0.0
    %509 = vmatmul.mubr.f32.gmra.mxu0 %v441
    %v510 = vpop.f32.mrf.mxu0
    %v511 = vadd.f32 0.0, %v510
    %v512 = vpop.f32.mrf.mxu0
    %513 = vdwg.mxu0
    %v514 = vadd.f32 %v443, %v511
    %v515 = vtanh.pop %v514
    %v516 = vmul.f32 %v86, %v515
    %v517 = vadd.f32 %v516, %v93
    %518 = vrot.lane.b32.xlu0 %v517, 96
    %v519 = vpop.permute.xlu0 %518
    %520 = vrot.lane.b32.xlu0 %v517, 64
    %v521 = vpop.permute.xlu0 %520
    %522 = vrot.lane.b32.xlu0 %v517, 32
    %v523 = vpop.permute.xlu0 %522
    %v524 = vmul.f32 %v519, %v439
    %v525 = vmul.f32 %v517, %v521
    %v526 = vadd.f32 %v524, %v525
    %v527 = vtanh.pop %v526
    %v528 = vmul.f32 %v523, %v527
    %s529 = scalar_lea.vmem [#allocation2], 40
    %v530 = vld [vmem:[%s529] sm:$0xff]
    %531 = vmatprep.subr.mxu0 0.0
    %532 = vmatpush1.msra.mxu0 %v80
    %533 = vmatprep.subr.mxu0 0.0
    %534 = vmatpush1.msra.mxu0 %v79
    %535 = vmatprep.subr.mxu0 0.0
    %536 = vmatpush1.msra.mxu0 %v78
    %537 = vmatprep.subr.mxu0 0.0
    %538 = vmatpush1.msra.mxu0 %v77
    %539 = vmatprep.subr.mxu0 0.0
    %540 = vmatpush1.msra.mxu0 %v76
    %541 = vmatprep.subr.mxu0 0.0
    %542 = vmatpush1.msra.mxu0 %v75
    %543 = vmatprep.subr.mxu0 0.0
    %544 = vmatpush1.msra.mxu0 %v74
    %545 = vmatprep.subr.mxu0 0.0
    %546 = vmatpush1.msra.mxu0 %v73
    %547 = vmatprep.subr.mxu0 0.0
    %548 = vmatpush1.msra.mxu0 %v72
    %549 = vmatprep.subr.mxu0 0.0
    %550 = vmatpush1.msra.mxu0 %v71
    %551 = vmatprep.subr.mxu0 0.0
    %552 = vmatpush1.msra.mxu0 %v70
    %553 = vmatprep.subr.mxu0 0.0
    %554 = vmatpush1.msra.mxu0 %v69
    %555 = vmatprep.subr.mxu0 0.0
    %556 = vmatpush1.msra.mxu0 %v68
    %557 = vmatprep.subr.mxu0 0.0
    %558 = vmatpush1.msra.mxu0 %v67
    %559 = vmatprep.subr.mxu0 0.0
    %560 = vmatpush1.msra.mxu0 %v66
    %561 = vmatprep.subr.mxu0 0.0
    %562 = vmatpush1.msra.mxu0 %v65
    %563 = vmatprep.subr.mxu0 0.0
    %564 = vmatpush2.msra.mxu0 0.0
    %565 = vmatprep.subr.mxu0 0.0
    %566 = vmatpush2.msra.mxu0 0.0
    %567 = vmatprep.subr.mxu0 0.0
    %568 = vmatpush2.msra.mxu0 0.0
    %569 = vmatprep.subr.mxu0 0.0
    %570 = vmatpush2.msra.mxu0 0.0
    %571 = vmatprep.subr.mxu0 0.0
    %572 = vmatpush2.msra.mxu0 0.0
    %573 = vmatprep.subr.mxu0 0.0
    %574 = vmatpush2.msra.mxu0 0.0
    %575 = vmatprep.subr.mxu0 0.0
    %576 = vmatpush2.msra.mxu0 0.0
    %577 = vmatprep.subr.mxu0 0.0
    %578 = vmatpush2.msra.mxu0 0.0
    %579 = vmatprep.subr.mxu0 0.0
    %580 = vmatpush2.msra.mxu0 0.0
    %581 = vmatprep.subr.mxu0 0.0
    %582 = vmatpush2.msra.mxu0 0.0
    %583 = vmatprep.subr.mxu0 0.0
    %584 = vmatpush2.msra.mxu0 0.0
    %585 = vmatprep.subr.mxu0 0.0
    %586 = vmatpush2.msra.mxu0 0.0
    %587 = vmatprep.subr.mxu0 0.0
    %588 = vmatpush2.msra.mxu0 0.0
    %589 = vmatprep.subr.mxu0 0.0
    %590 = vmatpush2.msra.mxu0 0.0
    %591 = vmatprep.subr.mxu0 0.0
    %592 = vmatpush2.msra.mxu0 0.0
    %593 = vmatprep.subr.mxu0 0.0
    %594 = vmatpush2.msra.mxu0 0.0
    %595 = vmatprep.mubr.f32.mxu0 0.0
    %596 = vmatmul.mubr.f32.gmra.mxu0 %v528
    %v597 = vpop.f32.mrf.mxu0
    %v598 = vadd.f32 0.0, %v597
    %v599 = vpop.f32.mrf.mxu0
    %600 = vdwg.mxu0
    %v601 = vadd.f32 %v530, %v598
    %v602 = vtanh.pop %v601
    %v603 = vmul.f32 %v86, %v602
    %v604 = vadd.f32 %v603, %v93
    %605 = vrot.lane.b32.xlu0 %v604, 96
    %v606 = vpop.permute.xlu0 %605
    %607 = vrot.lane.b32.xlu0 %v604, 64
    %v608 = vpop.permute.xlu0 %607
    %609 = vrot.lane.b32.xlu0 %v604, 32
    %v610 = vpop.permute.xlu0 %609
    %v611 = vmul.f32 %v606, %v526
    %v612 = vmul.f32 %v604, %v608
    %v613 = vadd.f32 %v611, %v612
    %v614 = vtanh.pop %v613
    %v615 = vmul.f32 %v610, %v614
    %s616 = scalar_lea.vmem [#allocation2], 48
    %v617 = vld [vmem:[%s616] sm:$0xff]
    %618 = vmatprep.subr.mxu0 0.0
    %619 = vmatpush1.msra.mxu0 %v80
    %620 = vmatprep.subr.mxu0 0.0
    %621 = vmatpush1.msra.mxu0 %v79
    %622 = vmatprep.subr.mxu0 0.0
    %623 = vmatpush1.msra.mxu0 %v78
    %624 = vmatprep.subr.mxu0 0.0
    %625 = vmatpush1.msra.mxu0 %v77
    %626 = vmatprep.subr.mxu0 0.0
    %627 = vmatpush1.msra.mxu0 %v76
    %628 = vmatprep.subr.mxu0 0.0
    %629 = vmatpush1.msra.mxu0 %v75
    %630 = vmatprep.subr.mxu0 0.0
    %631 = vmatpush1.msra.mxu0 %v74
    %632 = vmatprep.subr.mxu0 0.0
    %633 = vmatpush1.msra.mxu0 %v73
    %634 = vmatprep.subr.mxu0 0.0
    %635 = vmatpush1.msra.mxu0 %v72
    %636 = vmatprep.subr.mxu0 0.0
    %637 = vmatpush1.msra.mxu0 %v71
    %638 = vmatprep.subr.mxu0 0.0
    %639 = vmatpush1.msra.mxu0 %v70
    %640 = vmatprep.subr.mxu0 0.0
    %641 = vmatpush1.msra.mxu0 %v69
    %642 = vmatprep.subr.mxu0 0.0
    %643 = vmatpush1.msra.mxu0 %v68
    %644 = vmatprep.subr.mxu0 0.0
    %645 = vmatpush1.msra.mxu0 %v67
    %646 = vmatprep.subr.mxu0 0.0
    %647 = vmatpush1.msra.mxu0 %v66
    %648 = vmatprep.subr.mxu0 0.0
    %649 = vmatpush1.msra.mxu0 %v65
    %650 = vmatprep.subr.mxu0 0.0
    %651 = vmatpush2.msra.mxu0 0.0
    %652 = vmatprep.subr.mxu0 0.0
    %653 = vmatpush2.msra.mxu0 0.0
    %654 = vmatprep.subr.mxu0 0.0
    %655 = vmatpush2.msra.mxu0 0.0
    %656 = vmatprep.subr.mxu0 0.0
    %657 = vmatpush2.msra.mxu0 0.0
    %658 = vmatprep.subr.mxu0 0.0
    %659 = vmatpush2.msra.mxu0 0.0
    %660 = vmatprep.subr.mxu0 0.0
    %661 = vmatpush2.msra.mxu0 0.0
    %662 = vmatprep.subr.mxu0 0.0
    %663 = vmatpush2.msra.mxu0 0.0
    %664 = vmatprep.subr.mxu0 0.0
    %665 = vmatpush2.msra.mxu0 0.0
    %666 = vmatprep.subr.mxu0 0.0
    %667 = vmatpush2.msra.mxu0 0.0
    %668 = vmatprep.subr.mxu0 0.0
    %669 = vmatpush2.msra.mxu0 0.0
    %670 = vmatprep.subr.mxu0 0.0
    %671 = vmatpush2.msra.mxu0 0.0
    %672 = vmatprep.subr.mxu0 0.0
    %673 = vmatpush2.msra.mxu0 0.0
    %674 = vmatprep.subr.mxu0 0.0
    %675 = vmatpush2.msra.mxu0 0.0
    %676 = vmatprep.subr.mxu0 0.0
    %677 = vmatpush2.msra.mxu0 0.0
    %678 = vmatprep.subr.mxu0 0.0
    %679 = vmatpush2.msra.mxu0 0.0
    %680 = vmatprep.subr.mxu0 0.0
    %681 = vmatpush2.msra.mxu0 0.0
    %682 = vmatprep.mubr.f32.mxu0 0.0
    %683 = vmatmul.mubr.f32.gmra.mxu0 %v615
    %v684 = vpop.f32.mrf.mxu0
    %v685 = vadd.f32 0.0, %v684
    %v686 = vpop.f32.mrf.mxu0
    %687 = vdwg.mxu0
    %v688 = vadd.f32 %v617, %v685
    %v689 = vtanh.pop %v688
    %v690 = vmul.f32 %v86, %v689
    %v691 = vadd.f32 %v690, %v93
    %692 = vrot.lane.b32.xlu0 %v691, 96
    %v693 = vpop.permute.xlu0 %692
    %694 = vrot.lane.b32.xlu0 %v691, 64
    %v695 = vpop.permute.xlu0 %694
    %696 = vrot.lane.b32.xlu0 %v691, 32
    %v697 = vpop.permute.xlu0 %696
    %v698 = vmul.f32 %v693, %v613
    %v699 = vmul.f32 %v691, %v695
    %v700 = vadd.f32 %v698, %v699
    %v701 = vtanh.pop %v700
    %v702 = vmul.f32 %v697, %v701
    %s703 = scalar_lea.vmem [#allocation2], 56
    %v704 = vld [vmem:[%s703] sm:$0xff]
    %705 = vmatprep.subr.mxu0 0.0
    %706 = vmatpush1.msra.mxu0 %v80
    %707 = vmatprep.subr.mxu0 0.0
    %708 = vmatpush1.msra.mxu0 %v79
    %709 = vmatprep.subr.mxu0 0.0
    %710 = vmatpush1.msra.mxu0 %v78
    %711 = vmatprep.subr.mxu0 0.0
    %712 = vmatpush1.msra.mxu0 %v77
    %713 = vmatprep.subr.mxu0 0.0
    %714 = vmatpush1.msra.mxu0 %v76
    %715 = vmatprep.subr.mxu0 0.0
    %716 = vmatpush1.msra.mxu0 %v75
    %717 = vmatprep.subr.mxu0 0.0
    %718 = vmatpush1.msra.mxu0 %v74
    %719 = vmatprep.subr.mxu0 0.0
    %720 = vmatpush1.msra.mxu0 %v73
    %721 = vmatprep.subr.mxu0 0.0
    %722 = vmatpush1.msra.mxu0 %v72
    %723 = vmatprep.subr.mxu0 0.0
    %724 = vmatpush1.msra.mxu0 %v71
    %725 = vmatprep.subr.mxu0 0.0
    %726 = vmatpush1.msra.mxu0 %v70
    %727 = vmatprep.subr.mxu0 0.0
    %728 = vmatpush1.msra.mxu0 %v69
    %729 = vmatprep.subr.mxu0 0.0
    %730 = vmatpush1.msra.mxu0 %v68
    %731 = vmatprep.subr.mxu0 0.0
    %732 = vmatpush1.msra.mxu0 %v67
    %733 = vmatprep.subr.mxu0 0.0
    %734 = vmatpush1.msra.mxu0 %v66
    %735 = vmatprep.subr.mxu0 0.0
    %736 = vmatpush1.msra.mxu0 %v65
    %737 = vmatprep.subr.mxu0 0.0
    %738 = vmatpush2.msra.mxu0 0.0
    %739 = vmatprep.subr.mxu0 0.0
    %740 = vmatpush2.msra.mxu0 0.0
    %741 = vmatprep.subr.mxu0 0.0
    %742 = vmatpush2.msra.mxu0 0.0
    %743 = vmatprep.subr.mxu0 0.0
    %744 = vmatpush2.msra.mxu0 0.0
    %745 = vmatprep.subr.mxu0 0.0
    %746 = vmatpush2.msra.mxu0 0.0
    %747 = vmatprep.subr.mxu0 0.0
    %748 = vmatpush2.msra.mxu0 0.0
    %749 = vmatprep.subr.mxu0 0.0
    %750 = vmatpush2.msra.mxu0 0.0
    %751 = vmatprep.subr.mxu0 0.0
    %752 = vmatpush2.msra.mxu0 0.0
    %753 = vmatprep.subr.mxu0 0.0
    %754 = vmatpush2.msra.mxu0 0.0
    %755 = vmatprep.subr.mxu0 0.0
    %756 = vmatpush2.msra.mxu0 0.0
    %757 = vmatprep.subr.mxu0 0.0
    %758 = vmatpush2.msra.mxu0 0.0
    %759 = vmatprep.subr.mxu0 0.0
    %760 = vmatpush2.msra.mxu0 0.0
    %761 = vmatprep.subr.mxu0 0.0
    %762 = vmatpush2.msra.mxu0 0.0
    %763 = vmatprep.subr.mxu0 0.0
    %764 = vmatpush2.msra.mxu0 0.0
    %765 = vmatprep.subr.mxu0 0.0
    %766 = vmatpush2.msra.mxu0 0.0
    %767 = vmatprep.subr.mxu0 0.0
    %768 = vmatpush2.msra.mxu0 0.0
    %769 = vmatprep.mubr.f32.mxu0 0.0
    %770 = vmatmul.mubr.f32.gmra.mxu0 %v702
    %v771 = vpop.f32.mrf.mxu0
    %v772 = vadd.f32 0.0, %v771
    %v773 = vpop.f32.mrf.mxu0
    %774 = vdwg.mxu0
    %v775 = vadd.f32 %v704, %v772
    %v776 = vtanh.pop %v775
    %v777 = vmul.f32 %v86, %v776
    %v778 = vadd.f32 %v777, %v93
    %779 = vrot.lane.b32.xlu0 %v778, 96
    %v780 = vpop.permute.xlu0 %779
    %781 = vrot.lane.b32.xlu0 %v778, 64
    %v782 = vpop.permute.xlu0 %781
    %783 = vrot.lane.b32.xlu0 %v778, 32
    %v784 = vpop.permute.xlu0 %783
    %v785 = vmul.f32 %v780, %v700
    %v786 = vmul.f32 %v778, %v782
    %v787 = vadd.f32 %v785, %v786
    %v788 = vtanh.pop %v787
    %v789 = vmul.f32 %v784, %v788
    %v790 = vld [vmem:[#allocation7] sm:$0xff]
    %v791 = vld [vmem:[#allocation7 + $0x8] sm:$0xff]
    %v792 = vld [vmem:[#allocation7 + $0x10] sm:$0xff]
    %v793 = vld [vmem:[#allocation7 + $0x18] sm:$0xff]
    %v794 = vld [vmem:[#allocation7 + $0x20] sm:$0xff]
    %v795 = vld [vmem:[#allocation7 + $0x28] sm:$0xff]
    %v796 = vld [vmem:[#allocation7 + $0x30] sm:$0xff]
    %v797 = vld [vmem:[#allocation7 + $0x38] sm:$0xff]
    %v798 = vld [vmem:[#allocation7 + $0x40] sm:$0xff]
    %v799 = vld [vmem:[#allocation7 + $0x48] sm:$0xff]
    %v800 = vld [vmem:[#allocation7 + $0x50] sm:$0xff]
    %v801 = vld [vmem:[#allocation7 + $0x58] sm:$0xff]
    %v802 = vld [vmem:[#allocation7 + $0x60] sm:$0xff]
    %v803 = vld [vmem:[#allocation7 + $0x68] sm:$0xff]
    %v804 = vld [vmem:[#allocation7 + $0x70] sm:$0xff]
    %v805 = vld [vmem:[#allocation7 + $0x78] sm:$0xff]
    %v806 = vld [vmem:[%s5] sm:$0x1]
    %v808 = vlaneseq
    %v809 = vshrl.u32 %v808, 7
    %v810 = vsub.s32 0, %v809
    %v811 = vrot.slane %v806, %v810
    %813 = vmatprep.subr.mxu0 0.0
    %814 = vmatpush1.msra.mxu0 %v805
    %815 = vmatprep.subr.mxu0 0.0
    %816 = vmatpush1.msra.mxu0 %v804
    %817 = vmatprep.subr.mxu0 0.0
    %818 = vmatpush1.msra.mxu0 %v803
    %819 = vmatprep.subr.mxu0 0.0
    %820 = vmatpush1.msra.mxu0 %v802
    %821 = vmatprep.subr.mxu0 0.0
    %822 = vmatpush1.msra.mxu0 %v801
    %823 = vmatprep.subr.mxu0 0.0
    %824 = vmatpush1.msra.mxu0 %v800
    %825 = vmatprep.subr.mxu0 0.0
    %826 = vmatpush1.msra.mxu0 %v799
    %827 = vmatprep.subr.mxu0 0.0
    %828 = vmatpush1.msra.mxu0 %v798
    %829 = vmatprep.subr.mxu0 0.0
    %830 = vmatpush1.msra.mxu0 %v797
    %831 = vmatprep.subr.mxu0 0.0
    %832 = vmatpush1.msra.mxu0 %v796
    %833 = vmatprep.subr.mxu0 0.0
    %834 = vmatpush1.msra.mxu0 %v795
    %835 = vmatprep.subr.mxu0 0.0
    %836 = vmatpush1.msra.mxu0 %v794
    %837 = vmatprep.subr.mxu0 0.0
    %838 = vmatpush1.msra.mxu0 %v793
    %839 = vmatprep.subr.mxu0 0.0
    %840 = vmatpush1.msra.mxu0 %v792
    %841 = vmatprep.subr.mxu0 0.0
    %842 = vmatpush1.msra.mxu0 %v791
    %843 = vmatprep.subr.mxu0 0.0
    %844 = vmatpush1.msra.mxu0 %v790
    %845 = vmatprep.subr.mxu0 0.0
    %846 = vmatpush2.msra.mxu0 0.0
    %847 = vmatprep.subr.mxu0 0.0
    %848 = vmatpush2.msra.mxu0 0.0
    %849 = vmatprep.subr.mxu0 0.0
    %850 = vmatpush2.msra.mxu0 0.0
    %851 = vmatprep.subr.mxu0 0.0
    %852 = vmatpush2.msra.mxu0 0.0
    %853 = vmatprep.subr.mxu0 0.0
    %854 = vmatpush2.msra.mxu0 0.0
    %855 = vmatprep.subr.mxu0 0.0
    %856 = vmatpush2.msra.mxu0 0.0
    %857 = vmatprep.subr.mxu0 0.0
    %858 = vmatpush2.msra.mxu0 0.0
    %859 = vmatprep.subr.mxu0 0.0
    %860 = vmatpush2.msra.mxu0 0.0
    %861 = vmatprep.subr.mxu0 0.0
    %862 = vmatpush2.msra.mxu0 0.0
    %863 = vmatprep.subr.mxu0 0.0
    %864 = vmatpush2.msra.mxu0 0.0
    %865 = vmatprep.subr.mxu0 0.0
    %866 = vmatpush2.msra.mxu0 0.0
    %867 = vmatprep.subr.mxu0 0.0
    %868 = vmatpush2.msra.mxu0 0.0
    %869 = vmatprep.subr.mxu0 0.0
    %870 = vmatpush2.msra.mxu0 0.0
    %871 = vmatprep.subr.mxu0 0.0
    %872 = vmatpush2.msra.mxu0 0.0
    %873 = vmatprep.subr.mxu0 0.0
    %874 = vmatpush2.msra.mxu0 0.0
    %875 = vmatprep.subr.mxu0 0.0
    %876 = vmatpush2.msra.mxu0 0.0
    %877 = vmatprep.mubr.f32.mxu0 0.0
    %878 = vmatmul.mubr.f32.gmra.mxu0 %v789
    %v879 = vpop.f32.mrf.mxu0
    %v880 = vadd.f32 %v811, %v879
    %v881 = vpop.f32.mrf.mxu0
    %882 = vdwg.mxu0
    %v883 = vlaneseq
    %v884 = vand.u32 %v883, 127
    %vm885 = vcmp.lt.s32.totalorder %v884, 3
    %v886 = vsel %vm885, %v880, -1e+30
    %887 = vmax.xlane.f32.xlu0 %v886
    %v888 = vpop.xlane.xlu0 %887
    %v889 = vsub.f32 %v886, %v888
    %v890 = vmul.f32 %v889, 1.442695
    %v891 = vpow.pop %v890
    %v892 = vsel %vm885, %v891, 0.0
    %893 = vadd.xlane.f32.xlu0 %v892
    %v894 = vpop.xlane.xlu0 %893
    %v895 = vrcp.pop %v894
    %v896 = vmul.f32 %v892, %v895
    %897 = vst [vmem:[#allocation8] sm:$0xff] %v896
    // Predicated region
    $region38: #{tpu_custom_call.1} parent=1 // pred_check
      _
    $region39: #{tpu_custom_call.1} parent=1 // pred_check_branch
      %899 = sbr.rel (0) target = $region41
    $region40: #{tpu_custom_call.1} parent=1 // pred_region
      %s901 = ssub.s32 128, 128
      %902 = vsyncadd [#allocation4], %s901
      %s904 = sshll.u32 [#allocation8], 4
      %s905 = int_to_ptr.vmem [resolvable:$true] %s904
      %907 = dma.vmem_to_hbm [thread:$0]  %s905, 128, %s6, [#allocation4]
    $region41: #{tpu_custom_call.1} parent=1 // pred_fallthru
      _
    // Predicated region
    $region42: #{tpu_custom_call.1} parent=1 // pred_check
      _
    $region43: #{tpu_custom_call.1} parent=1 // pred_check_branch
      %909 = sbr.rel (0) target = $region45
    $region44: #{tpu_custom_call.1} parent=1 // pred_region
      %910 = dma.done [#allocation4], 128
    $region45: #{tpu_custom_call.1} parent=1 // pred_fallthru
      _
    %911 = vsyncpa [#allocation3], 1
    %912 = vsyncpa [#allocation6], 1
    %913 = vsyncpa [#allocation4], 1

</llo_original>
